<compile_context>
chip_gen: v6e
topology: v6e:2x2x1
jax: 0.10.0
libtpu: 0.0.40
codegen_flags: <defaults>
</compile_context>

<pallas_src>
import math

import jax
import jax.numpy as jnp
from jax.experimental import pallas as pl
from jax.experimental.pallas import tpu as pltpu


_SUBLANE = 8
_TARGET_BLOCK_BYTES = 2 * 1024 * 1024   # ~2 MiB input blocks pipeline near HBM roofline
_MIN_GRID_STEPS = 8                     # pipelining overlap + v7x megacore sharding
_UNROLL_GROUP_LIMIT = 8                 # fully unroll the G-loop up to this many groups
_DEFAULT_VMEM_LIMIT = 64 * 1024 * 1024  # never request more than v7x's 64 MiB per TC


def _vmem_budget():
    """(scoped vmem_limit_bytes to request, tile budget for live blocks)."""
    try:
        cap = int(pltpu.get_tpu_info().vmem_capacity_bytes)
    except Exception:  # not on TPU / API unavailable -> conservative (v7x per-TC)
        cap = _DEFAULT_VMEM_LIMIT
    limit = min(cap, _DEFAULT_VMEM_LIMIT)
    # Keep live double-buffered in+out well under the limit (headroom for
    # compiler temporaries / the f32 accumulator slab): ~40 MiB when limit=64 MiB.
    return limit, (limit * 5) // 8


def _choose_block_b(batch: int, in_row_bytes: int, out_row_bytes: int,
                    acc_row_bytes: int, tile_budget: int) -> int:
    """Batch tile: multiple of 8, ~2 MiB input blocks, >= _MIN_GRID_STEPS steps."""
    if batch <= _SUBLANE:
        return batch  # full-extent single block (block dim == array dim is legal)
    per_row_vmem = 2 * (in_row_bytes + out_row_bytes) + acc_row_bytes  # double-buffered io
    by_vmem = tile_budget // max(per_row_vmem, 1)
    by_bytes = max(_SUBLANE, _TARGET_BLOCK_BYTES // max(in_row_bytes, 1))
    by_steps = pl.cdiv(batch, _MIN_GRID_STEPS)
    tb = min(by_vmem, by_bytes, by_steps)
    return max(_SUBLANE, (tb // _SUBLANE) * _SUBLANE)


def _group_weight_kernel(gate_ref, x_ref, o_ref):
    # gate_ref: (G,) f32 in SMEM -- sigmoid(weight), precomputed in the wrapper.
    # x_ref:    (TB, G*D) flattened expert logits in VMEM.
    # o_ref:    (TB, D) mixed logits.
    n_groups = gate_ref.shape[0]
    d = o_ref.shape[-1]

    if n_groups <= _UNROLL_GROUP_LIMIT:
        # Small G: fully unrolled chain of scalar-gated lane-dense FMAs.
        acc = gate_ref[0] * x_ref[:, 0:d].astype(jnp.float32)
        for g in range(1, n_groups):
            acc = acc + gate_ref[g] * x_ref[:, g * d:(g + 1) * d].astype(jnp.float32)
    else:
        # Large G: bounded live ranges via fori_loop with modest unroll.
        def body(g, acc):
            start = pl.multiple_of(g * d, d)
            slab = x_ref[:, pl.ds(start, d)].astype(jnp.float32)
            return acc + gate_ref[g] * slab

        acc = gate_ref[0] * x_ref[:, 0:d].astype(jnp.float32)
        acc = jax.lax.fori_loop(1, n_groups, body, acc, unroll=4)

    o_ref[...] = acc.astype(o_ref.dtype)


def simple_group_weight(expert_logits: jax.Array, weight: jax.Array) -> jax.Array:
    """expert_logits: (B, G, D); weight: (1, G, 1) -> (B, D)."""
    B, G, D = expert_logits.shape
    out_dtype = expert_logits.dtype
    in_itemsize = jnp.dtype(expert_logits.dtype).itemsize
    out_itemsize = jnp.dtype(out_dtype).itemsize

    # Gate values: sigmoid computed once outside the kernel, in f32.
    gates = jax.nn.sigmoid(weight.astype(jnp.float32)).reshape(G)

    # Free row-major flatten: (B, G, D) -> (B, G*D).  Batch becomes the sublane
    # dim of every block; per-group slabs are plain lane-aligned slices.
    x = expert_logits.reshape(B, G * D)

    # TODO(synk): for production shapes D should be a multiple of 128 (lane-dense
    # output stores); fix upstream (pad D once at the model level) rather than
    # adding an extra HBM pass per call here.

    vmem_limit, tile_budget = _vmem_budget()
    block_b = _choose_block_b(
        B,
        in_row_bytes=G * D * in_itemsize,
        out_row_bytes=D * out_itemsize,
        acc_row_bytes=D * 4,
        tile_budget=tile_budget,
    )
    grid = (pl.cdiv(B, block_b),)  # ragged last block is output-masked by Pallas

    cost = pl.CostEstimate(
        flops=2 * B * G * D,
        transcendentals=0,
        bytes_accessed=B * G * D * in_itemsize + B * D * out_itemsize + G * 4,
    )

    return pl.pallas_call(
        _group_weight_kernel,
        out_shape=jax.ShapeDtypeStruct((B, D), out_dtype),
        grid_spec=pltpu.PrefetchScalarGridSpec(
            num_scalar_prefetch=0,
            grid=grid,
            in_specs=[
                # (G,) gate scalars live in SMEM, shared across all grid steps.
                pl.BlockSpec(memory_space=pltpu.MemorySpace.SMEM),
                # Batch-tiled flattened input; last dim is the full G*D row ->
                # every DMA row is one contiguous run of the (B, G, D) layout.
                pl.BlockSpec((block_b, G * D), lambda i: (i, 0)),
            ],
            out_specs=pl.BlockSpec((block_b, D), lambda i: (i, 0)),
        ),
        compiler_params=pltpu.CompilerParams(
            dimension_semantics=("parallel",),  # no carried reduction across grid
            vmem_limit_bytes=vmem_limit,
        ),
        cost_estimate=cost,
    )(gates, x)


if __name__ == "__main__":
    key = jax.random.PRNGKey(0)
    k_w, k_x = jax.random.split(key)

    B, G, D = 2, 4, 16  # batch, n_groups, feature dim

    # Parameter init matching the module: uniform(-stdv, stdv), stdv = 1/sqrt(G)
    stdv = 1.0 / math.sqrt(G)
    weight = jax.random.uniform(
        k_w, (1, G, 1), dtype=jnp.float32, minval=-stdv, maxval=stdv
    )
    expert_logits = jax.random.normal(k_x, (B, G, D), dtype=jnp.float32)

    out = jax.block_until_ready(simple_group_weight(expert_logits, weight))

    # Reference check against plain JAX (same math as the PyTorch forward).
    ref = jnp.sum(jax.nn.sigmoid(weight) * expert_logits, axis=1)
    assert out.shape == (B, D)
    assert jnp.allclose(out, ref, atol=1e-5, rtol=1e-5)

    # Exercise the multi-step tiled path (B=4096 -> 8 grid steps) and the
    # ragged last-block path (B=1000 is not a multiple of the batch tile).
    for b_big in (4096, 1000):
        xb = jax.random.normal(jax.random.PRNGKey(b_big), (b_big, G, D), dtype=jnp.float32)
        out_b = jax.block_until_ready(simple_group_weight(xb, weight))
        ref_b = jnp.sum(jax.nn.sigmoid(weight) * xb, axis=1)
        assert out_b.shape == (b_big, D)
        assert jnp.allclose(out_b, ref_b, atol=1e-5, rtol=1e-5)

    print("KERNEL_OK")
</pallas_src>

<mosaic_0001>
module attributes {stable_mosaic.version = 11 : i64} {
  func.func @_group_weight_kernel(%arg0: i32, %arg1: memref<4xf32, #tpu.memory_space<smem>>, %arg2: memref<2x64xf32, #tpu.memory_space<vmem>>, %arg3: memref<2x16xf32, #tpu.memory_space<vmem>>) attributes {dimension_semantics = [#tpu.dimension_semantics<parallel>], iteration_bounds = array<i64: 1>, scalar_prefetch = 0 : i64, scratch_operands = 0 : i64, tpu.core_type = #tpu.core_type<tc>, window_params = [{transform_indices = @transform_0, window_bounds = array<i64: 4>}, {transform_indices = @transform_1, window_bounds = array<i64: 2, 64>}, {transform_indices = @transform_2, window_bounds = array<i64: 2, 16>}]} {
    %c0 = arith.constant 0 : index
    %0 = memref.load %arg1[%c0] : memref<4xf32, #tpu.memory_space<smem>>
    %c0_0 = arith.constant 0 : index
    %c0_1 = arith.constant 0 : index
    %1 = vector.load %arg2[%c0_0, %c0_1] : memref<2x64xf32, #tpu.memory_space<vmem>>, vector<2x16xf32>
    %2 = vector.broadcast %0 : f32 to vector<2x16xf32>
    %3 = arith.mulf %2, %1 : vector<2x16xf32>
    %c1 = arith.constant 1 : index
    %4 = memref.load %arg1[%c1] : memref<4xf32, #tpu.memory_space<smem>>
    %c0_2 = arith.constant 0 : index
    %c16 = arith.constant 16 : index
    %5 = vector.load %arg2[%c0_2, %c16] : memref<2x64xf32, #tpu.memory_space<vmem>>, vector<2x16xf32>
    %6 = vector.broadcast %4 : f32 to vector<2x16xf32>
    %7 = arith.mulf %6, %5 : vector<2x16xf32>
    %8 = arith.addf %3, %7 : vector<2x16xf32>
    %c2 = arith.constant 2 : index
    %9 = memref.load %arg1[%c2] : memref<4xf32, #tpu.memory_space<smem>>
    %c0_3 = arith.constant 0 : index
    %c32 = arith.constant 32 : index
    %10 = vector.load %arg2[%c0_3, %c32] : memref<2x64xf32, #tpu.memory_space<vmem>>, vector<2x16xf32>
    %11 = vector.broadcast %9 : f32 to vector<2x16xf32>
    %12 = arith.mulf %11, %10 : vector<2x16xf32>
    %13 = arith.addf %8, %12 : vector<2x16xf32>
    %c3 = arith.constant 3 : index
    %14 = memref.load %arg1[%c3] : memref<4xf32, #tpu.memory_space<smem>>
    %c0_4 = arith.constant 0 : index
    %c48 = arith.constant 48 : index
    %15 = vector.load %arg2[%c0_4, %c48] : memref<2x64xf32, #tpu.memory_space<vmem>>, vector<2x16xf32>
    %16 = vector.broadcast %14 : f32 to vector<2x16xf32>
    %17 = arith.mulf %16, %15 : vector<2x16xf32>
    %18 = arith.addf %13, %17 : vector<2x16xf32>
    %c0_5 = arith.constant 0 : index
    %c0_6 = arith.constant 0 : index
    %19 = vector.load %arg3[%c0_5, %c0_6] : memref<2x16xf32, #tpu.memory_space<vmem>>, vector<2x16xf32>
    tpu.vector_store %arg3[%c0_5, %c0_6], %18 {strides = array<i32>} : memref<2x16xf32, #tpu.memory_space<vmem>>, vector<2x16xf32>,
    return
  }
  func.func @transform_0(%arg0: i32) -> i32 {
    %c0_i32 = arith.constant 0 : i32
    %c0_i32_0 = arith.constant 0 : i32
    return %c0_i32 : i32
  }
  func.func @transform_1(%arg0: i32) -> (i32, i32) {
    %c0_i32 = arith.constant 0 : i32
    %c0_i32_0 = arith.constant 0 : i32
    return %arg0, %c0_i32 : i32, i32
  }
  func.func @transform_2(%arg0: i32) -> (i32, i32) {
    %c0_i32 = arith.constant 0 : i32
    %c0_i32_0 = arith.constant 0 : i32
    return %arg0, %c0_i32 : i32, i32
  }
}

</mosaic_0001>

<llo_original>
// kernel: tpu_custom_call.1
$region0: #{tpu_custom_call.1}
  #allocation0 [shape = 'u32[]', space=smem, size = 0x4, offset = 0x4, fixed_abs, tag = 'smem constant byte address 0x4 - core index']
  #allocation1 [shape = 'u32[144,128]{1,0:T(1,128)}', space=vmem, size = 0x12000, scoped, tag = 'internal scratch']
  %s0 = inlined_call_operand.hbm [shape: f32[4], index: 0, kind: input, shape index: {}]
  %s1 = inlined_call_operand.hbm [shape: f32[2,64], index: 1, kind: input, shape index: {}]
  %s2 = inlined_call_operand.hbm [shape: f32[2,16], index: 2, kind: output, shape index: {}]
  %s3 = sld [smem:[#allocation0]]
  $region26: #{tpu_custom_call.1} parent=0
    _
  %s5 = ssub.s32 1, %s3
  %s6 = scalar_select 0, %s5, %s3
  $region1: #{tpu_custom_call.1} parent=0
    #allocation2 [shape = 'u8[512]{0}', space=smem, size = 0x200, scoped, tag = 'input window, operand 0, single buffered']
    #allocation3 [shape = 's32[1]{0}', space=sflag, size = 0x4, scoped, tag = 'scoped memory for tpu_custom_call.1']
    #allocation4 [shape = 's32[1]{0}', space=sflag, size = 0x4, scoped, tag = 'scoped memory for tpu_custom_call.1']
    #allocation5 [shape = 's32[1]{0}', space=sflag, size = 0x4, scoped, tag = 'scoped memory for tpu_custom_call.1']
    #allocation6 [shape = 'u8[1024]{0}', space=vmem, size = 0x400, scoped, tag = 'input window, operand 1, single buffered']
    #allocation7 [shape = 'u8[1024]{0}', space=vmem, size = 0x400, scoped, tag = 'output window, operand 0, single buffered']
    %7 = vsyncpa [#allocation5], 0
    %8 = vsyncpa [#allocation3], 0
    %9 = vsyncpa [#allocation4], 0
    // Predicated region
    $region2: #{tpu_custom_call.1} parent=1 // pred_check
      _
    $region3: #{tpu_custom_call.1} parent=1 // pred_check_branch
      %11 = sbr.rel (0) target = $region5
    $region4: #{tpu_custom_call.1} parent=1 // pred_region
      %s13 = ssub.s32 16, 16
      %14 = vsyncadd [#allocation5], %s13
      %17 = dma.hbm_to_smem %s0, 16, [#allocation2], [#allocation5]
    $region5: #{tpu_custom_call.1} parent=1 // pred_fallthru
      _
    // Predicated region
    $region6: #{tpu_custom_call.1} parent=1 // pred_check
      _
    $region7: #{tpu_custom_call.1} parent=1 // pred_check_branch
      %19 = sbr.rel (0) target = $region9
    $region8: #{tpu_custom_call.1} parent=1 // pred_region
      %s21 = ssub.s32 32, 32
      %22 = vsyncadd [#allocation3], %s21
      %s24 = sshll.u32 [#allocation6], 4
      %s25 = int_to_ptr.vmem [resolvable:$true] %s24
      %27 = dma.hbm_to_vmem [thread:$0]  %s1, 32, %s25, [#allocation3]
    $region9: #{tpu_custom_call.1} parent=1 // pred_fallthru
      _
    // Predicated region
    $region10: #{tpu_custom_call.1} parent=1 // pred_check
      _
    $region11: #{tpu_custom_call.1} parent=1 // pred_check_branch
      %29 = sbr.rel (0) target = $region13
    $region12: #{tpu_custom_call.1} parent=1 // pred_region
      %30 = dma.done [#allocation5], 16
    $region13: #{tpu_custom_call.1} parent=1 // pred_fallthru
      _
    // Predicated region
    $region14: #{tpu_custom_call.1} parent=1 // pred_check
      _
    $region15: #{tpu_custom_call.1} parent=1 // pred_check_branch
      %32 = sbr.rel (0) target = $region17
    $region16: #{tpu_custom_call.1} parent=1 // pred_region
      %33 = dma.done [#allocation3], 32
    $region17: #{tpu_custom_call.1} parent=1 // pred_fallthru
      _
    %34 = sfence
    %s35 = sld [smem:[#allocation2]]
    %v36 = vld [vmem:[#allocation6] sm:$0x3]
    %v37 = vstv %s35
    %v38 = vmul.f32 %v37, %v36
    %s39 = sld [smem:[#allocation2 + $0x1]]
    %v40 = vstv %s39
    %v41 = vmul.f32 %v40, %v36
    %43 = vrot.lane.b32.xlu0 %v41, 112
    %v44 = vpop.permute.xlu0 %43
    %v46 = vadd.f32 %v38, %v44
    %s47 = sld [smem:[#allocation2 + $0x2]]
    %v48 = vstv %s47
    %v49 = vmul.f32 %v48, %v36
    %51 = vrot.lane.b32.xlu0 %v49, 96
    %v52 = vpop.permute.xlu0 %51
    %v54 = vadd.f32 %v46, %v52
    %s55 = sld [smem:[#allocation2 + $0x3]]
    %v56 = vstv %s55
    %v57 = vmul.f32 %v56, %v36
    %59 = vrot.lane.b32.xlu0 %v57, 80
    %v60 = vpop.permute.xlu0 %59
    %v62 = vadd.f32 %v54, %v60
    %vm63 = vcmask 123904
    %64 = vst.msk [vmem:[#allocation7] sm:$0x3] %vm63, %v62
    // Predicated region
    $region18: #{tpu_custom_call.1} parent=1 // pred_check
      _
    $region19: #{tpu_custom_call.1} parent=1 // pred_check_branch
      %66 = sbr.rel (0) target = $region21
    $region20: #{tpu_custom_call.1} parent=1 // pred_region
      %s68 = ssub.s32 32, 32
      %69 = vsyncadd [#allocation4], %s68
      %s71 = sshll.u32 [#allocation7], 4
      %s72 = int_to_ptr.vmem [resolvable:$true] %s71
      %74 = dma.vmem_to_hbm [thread:$0]  %s72, 32, %s2, [#allocation4]
    $region21: #{tpu_custom_call.1} parent=1 // pred_fallthru
      _
    // Predicated region
    $region22: #{tpu_custom_call.1} parent=1 // pred_check
      _
    $region23: #{tpu_custom_call.1} parent=1 // pred_check_branch
      %76 = sbr.rel (0) target = $region25
    $region24: #{tpu_custom_call.1} parent=1 // pred_region
      %77 = dma.done [#allocation4], 32
    $region25: #{tpu_custom_call.1} parent=1 // pred_fallthru
      _
    %78 = vsyncpa [#allocation3], 1
    %79 = vsyncpa [#allocation4], 1
    %80 = vsyncpa [#allocation5], 1

</llo_original>
